<compile_context>
chip_gen: v7x
topology: tpu7x:2x2x1
jax: 0.10.0
libtpu: 0.0.40
codegen_flags: <defaults>
</compile_context>

<pallas_src>
import jax
import jax.numpy as jnp
from jax.experimental import pallas as pl
from jax.experimental.pallas import tpu as pltpu


def _make_kernel(use_bf16_mxu):
    """Fused im2col-matmul conv + bias + LeakyReLU(0.01) + folded BatchNorm, one image/step."""

    def kernel(cols_ref, w_ref, params_ref, o_ref):
        # cols_ref   : (1, C*K*K, H*W)  im2col patches for this image (VMEM)
        # w_ref      : (Cout, C*K*K)    reshaped conv weights
        # params_ref : (C, 3)           [bias, bn_scale, bn_shift] per output channel
        # o_ref      : (1, C, H*W)      lane-dense output tile (H*W multiple of 128)
        cols = cols_ref[0]                       # (C*K*K, H*W)
        w = w_ref[...]                           # (Cout, C*K*K)
        if use_bf16_mxu:
            cols = cols.astype(jnp.bfloat16)
            w = w.astype(jnp.bfloat16)
        # Single MXU matmul: output dim H*W (>=128) is the lane-dense MXU N dimension.
        y = jnp.dot(w, cols, preferred_element_type=jnp.float32)    # (Cout, H*W)

        bias = params_ref[:, 0:1]                # (C, 1) broadcast along lanes
        scale = params_ref[:, 1:2]
        shift = params_ref[:, 2:3]
        y = y + bias                             # conv bias
        y = jnp.where(y >= 0, y, 0.01 * y)       # LeakyReLU(0.01)  (Dropout2d = identity, eval)
        y = y * scale + shift                    # BatchNorm2d (eval, folded)
        o_ref[0] = y.astype(o_ref.dtype)

    return kernel


def simple_block_forward(x_nchw, w_oihw, bias, gamma, beta, run_mean, run_var,
                         eps=1e-5, use_bf16_mxu=False):
    N, C, H, W = x_nchw.shape
    Cout, Cin, K, _ = w_oihw.shape
    assert Cout == C and Cin == C and K % 2 == 1        # module asserts odd kernel
    p = (K - 1) // 2
    HW = H * W
    CKK = C * K * K

    # --- wrapper glue (plain JAX, NCHW kept throughout; no layout transposes) ---
    x = x_nchw.astype(jnp.float32)
    xp = jnp.pad(x, ((0, 0), (0, 0), (p, p), (p, p)))   # SAME padding (odd K)
    # im2col: cols[n, ci*K*K + ky*K + kx, h*W + w] = xp[n, ci, h+ky, w+kx]
    patches = [xp[:, :, ky:ky + H, kx:kx + W] for ky in range(K) for kx in range(K)]
    cols = jnp.stack(patches, axis=2).reshape(N, CKK, HW)          # (N, C*K*K, H*W)

    # Weight reshape matches cols' (ci, ky, kx) ordering — no transpose needed.
    w_mat = w_oihw.astype(jnp.float32).reshape(C, CKK)             # (Cout, C*K*K)

    # Fold BatchNorm (eval) into per-channel scale/shift; coalesce with conv bias.
    scale = gamma / jnp.sqrt(run_var + eps)
    shift = beta - run_mean * scale
    params = jnp.stack([bias, scale, shift], axis=1).astype(jnp.float32)   # (C, 3)

    out = pl.pallas_call(
        _make_kernel(use_bf16_mxu),
        out_shape=jax.ShapeDtypeStruct((N, C, HW), jnp.float32),
        grid_spec=pltpu.PrefetchScalarGridSpec(
            num_scalar_prefetch=0,
            grid=(N,),                                             # one whole image per step
            in_specs=[
                pl.BlockSpec((1, CKK, HW), lambda n: (n, 0, 0)),   # 256-lane-dense patches
                pl.BlockSpec((C, CKK), lambda n: (0, 0)),          # weights, resident
                pl.BlockSpec((C, 3), lambda n: (0, 0)),            # coalesced epilogue params
            ],
            out_specs=pl.BlockSpec((1, C, HW), lambda n: (n, 0, 0)),
        ),
        compiler_params=pltpu.CompilerParams(
            dimension_semantics=("parallel",),                     # batch axis: megacore-splittable
            vmem_limit_bytes=32 * 1024 * 1024,                     # explicit budget (safe on v5e/v6e/v7x)
        ),
    )(cols, w_mat, params)

    return out.reshape(N, C, H, W)                                 # contiguous reshape, no transpose


if __name__ == "__main__":
    # SimpleBlock(ch=4, kernel=3, stride=1, dropout=0.25); input NCHW (2, 4, 16, 16)
    N, C, H, W, K = 2, 4, 16, 16, 3
    key = jax.random.PRNGKey(0)
    k1, k2, k3, k4, k5, k6, k7 = jax.random.split(key, 7)

    x = jax.random.normal(k1, (N, C, H, W), jnp.float32)
    conv_w = jax.random.normal(k2, (C, C, K, K), jnp.float32) * 0.1     # (Cout, Cin, K, K)
    conv_b = jax.random.normal(k3, (C,), jnp.float32) * 0.1
    bn_gamma = 1.0 + 0.1 * jax.random.normal(k4, (C,), jnp.float32)
    bn_beta = 0.1 * jax.random.normal(k5, (C,), jnp.float32)
    bn_mean = 0.1 * jax.random.normal(k6, (C,), jnp.float32)
    bn_var = jnp.abs(jax.random.normal(k7, (C,), jnp.float32)) + 0.5
    eps = 1e-5

    out = simple_block_forward(x, conv_w, conv_b, bn_gamma, bn_beta, bn_mean, bn_var, eps)
    out = jax.block_until_ready(out)

    # pure-JAX reference (conv -> identity dropout -> leaky relu -> batchnorm eval)
    ref = jax.lax.conv_general_dilated(
        x, conv_w, window_strides=(1, 1), padding="SAME",
        dimension_numbers=("NCHW", "OIHW", "NCHW"))
    ref = ref + conv_b[None, :, None, None]
    ref = jnp.where(ref >= 0, ref, 0.01 * ref)
    ref = (ref - bn_mean[None, :, None, None]) / jnp.sqrt(bn_var + eps)[None, :, None, None]
    ref = ref * bn_gamma[None, :, None, None] + bn_beta[None, :, None, None]

    assert out.shape == (N, C, H, W)
    assert jnp.allclose(out, ref, atol=1e-4, rtol=1e-4), float(jnp.max(jnp.abs(out - ref)))
    print("KERNEL_OK")
</pallas_src>

<mosaic_0001>
module attributes {stable_mosaic.version = 11 : i64} {
  func.func @kernel(%arg0: i32, %arg1: memref<1x36x256xf32, #tpu.memory_space<vmem>>, %arg2: memref<4x36xf32, #tpu.memory_space<vmem>>, %arg3: memref<4x3xf32, #tpu.memory_space<vmem>>, %arg4: memref<1x4x256xf32, #tpu.memory_space<vmem>>) attributes {dimension_semantics = [#tpu.dimension_semantics<parallel>], iteration_bounds = array<i64: 2>, scalar_prefetch = 0 : i64, scratch_operands = 0 : i64, tpu.core_type = #tpu.core_type<tc>, window_params = [{transform_indices = @transform_0, window_bounds = array<i64: 1, 36, 256>}, {pipeline_mode = #tpu.pipeline_mode<synchronous>, transform_indices = @transform_1, window_bounds = array<i64: 4, 36>}, {pipeline_mode = #tpu.pipeline_mode<synchronous>, transform_indices = @transform_2, window_bounds = array<i64: 4, 3>}, {transform_indices = @transform_3, window_bounds = array<i64: 1, 4, 256>}]} {
    %c0 = arith.constant 0 : index
    %c0_0 = arith.constant 0 : index
    %c0_1 = arith.constant 0 : index
    %0 = vector.load %arg1[%c0, %c0_0, %c0_1] : memref<1x36x256xf32, #tpu.memory_space<vmem>>, vector<1x36x256xf32>
    %1 = vector.shape_cast %0 : vector<1x36x256xf32> to vector<36x256xf32>
    %c0_2 = arith.constant 0 : index
    %c0_3 = arith.constant 0 : index
    %2 = vector.load %arg2[%c0_2, %c0_3] : memref<4x36xf32, #tpu.memory_space<vmem>>, vector<4x36xf32>
    %cst = arith.constant dense<0.000000e+00> : vector<4x256xf32>
    %3 = tpu.matmul %2, %1, %cst {dimension_numbers = #tpu.dot_dimension_numbers<[1], [0], [0], [1], [0, 0, 1, 1], [], []>} : vector<4x36xf32>, vector<36x256xf32>, vector<4x256xf32> -> vector<4x256xf32>
    %c0_4 = arith.constant 0 : index
    %c0_5 = arith.constant 0 : index
    %4 = vector.load %arg3[%c0_4, %c0_5] : memref<4x3xf32, #tpu.memory_space<vmem>>, vector<4x1xf32>
    %c0_6 = arith.constant 0 : index
    %c1 = arith.constant 1 : index
    %5 = vector.load %arg3[%c0_6, %c1] : memref<4x3xf32, #tpu.memory_space<vmem>>, vector<4x1xf32>
    %c0_7 = arith.constant 0 : index
    %c2 = arith.constant 2 : index
    %6 = vector.load %arg3[%c0_7, %c2] : memref<4x3xf32, #tpu.memory_space<vmem>>, vector<4x1xf32>
    %7 = vector.broadcast %4 : vector<4x1xf32> to vector<4x256xf32>
    %8 = arith.addf %3, %7 : vector<4x256xf32>
    %cst_8 = arith.constant 0.000000e+00 : f32
    %9 = vector.broadcast %cst_8 : f32 to vector<4x256xf32>
    %10 = arith.cmpf oge, %8, %9 : vector<4x256xf32>
    %cst_9 = arith.constant 0.00999999977 : f32
    %11 = vector.broadcast %cst_9 : f32 to vector<4x256xf32>
    %12 = arith.mulf %11, %8 : vector<4x256xf32>
    %13 = arith.select %10, %8, %12 : vector<4x256xi1>, vector<4x256xf32>
    %14 = vector.broadcast %5 : vector<4x1xf32> to vector<4x256xf32>
    %15 = arith.mulf %13, %14 : vector<4x256xf32>
    %16 = vector.broadcast %6 : vector<4x1xf32> to vector<4x256xf32>
    %17 = arith.addf %15, %16 : vector<4x256xf32>
    %c0_10 = arith.constant 0 : index
    %c0_11 = arith.constant 0 : index
    %c0_12 = arith.constant 0 : index
    %18 = vector.load %arg4[%c0_10, %c0_11, %c0_12] : memref<1x4x256xf32, #tpu.memory_space<vmem>>, vector<1x4x256xf32>
    %19 = vector.shape_cast %18 : vector<1x4x256xf32> to vector<4x256xf32>
    %20 = vector.shape_cast %17 : vector<4x256xf32> to vector<1x4x256xf32>
    tpu.vector_store %arg4[%c0_10, %c0_11, %c0_12], %20 {strides = array<i32>} : memref<1x4x256xf32, #tpu.memory_space<vmem>>, vector<1x4x256xf32>,
    return
  }
  func.func @transform_0(%arg0: i32) -> (i32, i32, i32) {
    %c0_i32 = arith.constant 0 : i32
    %c0_i32_0 = arith.constant 0 : i32
    %c0_i32_1 = arith.constant 0 : i32
    return %arg0, %c0_i32, %c0_i32_0 : i32, i32, i32
  }
  func.func @transform_1(%arg0: i32) -> (i32, i32) {
    %c0_i32 = arith.constant 0 : i32
    %c0_i32_0 = arith.constant 0 : i32
    %c0_i32_1 = arith.constant 0 : i32
    return %c0_i32, %c0_i32_0 : i32, i32
  }
  func.func @transform_2(%arg0: i32) -> (i32, i32) {
    %c0_i32 = arith.constant 0 : i32
    %c0_i32_0 = arith.constant 0 : i32
    %c0_i32_1 = arith.constant 0 : i32
    return %c0_i32, %c0_i32_0 : i32, i32
  }
  func.func @transform_3(%arg0: i32) -> (i32, i32, i32) {
    %c0_i32 = arith.constant 0 : i32
    %c0_i32_0 = arith.constant 0 : i32
    %c0_i32_1 = arith.constant 0 : i32
    return %arg0, %c0_i32, %c0_i32_0 : i32, i32, i32
  }
}

</mosaic_0001>

<llo_original>
// kernel: tpu_custom_call.1
$region0: #{tpu_custom_call.1}
  #allocation0 [shape = 'u32[]', space=smem, size = 0x4, offset = 0x4, fixed_abs, tag = 'smem constant byte address 0x4 - core index']
  #allocation1 [shape = 'u32[144,128]{1,0:T(1,128)}', space=vmem, size = 0x12000, scoped, tag = 'internal scratch']
  %s0 = inlined_call_operand.vmem [shape: f32[2,36,256], index: 0, kind: input, shape index: {}]
  %s1 = inlined_call_operand.vmem [shape: f32[4,36], index: 1, kind: input, shape index: {}]
  %s2 = inlined_call_operand.vmem [shape: f32[4,3], index: 2, kind: input, shape index: {}]
  %s3 = inlined_call_operand.hbm [shape: f32[2,4,256], index: 3, kind: output, shape index: {}]
  %s4 = sld [smem:[#allocation0]]
  $region45: #{tpu_custom_call.1} parent=0
    _
  %s6 = ssub.s32 1, %s4
  %s7 = scalar_select 0, %s6, %s4
  $region1: #{tpu_custom_call.1} parent=0
    #allocation2 [shape = 'u8[8192]{0}', space=vmem, size = 0x2000, scoped, tag = 'output window, operand 0']
    #allocation3 [shape = 's32[2]{0}', space=sflag, size = 0x8, scoped, tag = 'scoped memory for tpu_custom_call.1']
    %8 = vsyncpa [#allocation3], 0
    %s9 = scalar_lea.sflag [#allocation3], 1
    %10 = vsyncpa %s9, 0
    loop: start=0, step=1, limit=4
    $region2: #{tpu_custom_call.1} parent=1 // loop_pre_header
      _
    $region3: #{tpu_custom_call.1} parent=1 // loop_header
      %s12 = sphi 0, %s16
      %p13 = scmp.ge.s32.totalorder %s12, 4
      %s22 = sphi 0, %s24
      %s25 = sphi 0, %s22
      %s26 = sphi 0, %s25
      %s42 = sphi 0, %s26
      %s46 = sphi 0, %s46
      %s48 = sphi 0, %s46
      %s49 = sphi 0, %s48
      %s63 = sphi 0, %s49
      %s67 = sphi 0, %s67
      %s69 = sphi 0, %s67
      %s70 = sphi 0, %s69
      %s84 = sphi 0, %s70
      %s90 = sphi 0, %s92
      %s93 = sphi 0, %s90
      %s94 = sphi 0, %s93
      %s110 = sphi 0, %s94
    $region4: #{tpu_custom_call.1} parent=1 // loop_header_branch
      %15 = sbr.rel (%p13) target = $region8
    $region5: #{tpu_custom_call.1} parent=1 // loop_body
      %s17 = ssub.s32 %s12, 1
      %s18 = ssub.s32 %s12, 2
      %s19 = sadd.s32 %s12, 1
      %s20 = ssub.s32 %s12, %s19
      %p21 = scmp.eq.s32.totalorder %s20, 0
      %s23 = sadd.s32 %s22, 1
      %s24 = scalar_select %p21, %s22, %s23
      %p27 = pneg %p21
      %p28 = scmp.eq.s32.totalorder %s12, 1
      %p29 = por %p27, %p28
      %p30 = scmp.ne.s32.totalorder %s22, %s25
      %p31 = scmp.eq.s32.totalorder %s12, 0
      %p32 = por %p30, %p31
      %p33 = scmp.ne.s32.totalorder %s22, %s25
      %p34 = scmp.eq.s32.totalorder %s17, 1
      %p35 = por %p33, %p34
      %p36 = scmp.ne.s32.totalorder %s25, %s26
      %p37 = scmp.eq.s32.totalorder %s17, 0
      %p38 = por %p36, %p37
      %p39 = scmp.ne.s32.totalorder %s25, %s26
      %p40 = scmp.eq.s32.totalorder %s18, 1
      %p41 = por %p39, %p40
      %p43 = scmp.ne.s32.totalorder %s26, %s42
      %p44 = scmp.eq.s32.totalorder %s18, 0
      %p45 = por %p43, %p44
      %s47 = sadd.s32 %s46, 1
      %p50 = scmp.eq.s32.totalorder %s12, 1
      %p51 = scmp.ne.s32.totalorder %s46, %s48
      %p52 = scmp.eq.s32.totalorder %s12, 0
      %p53 = por %p51, %p52
      %p54 = scmp.ne.s32.totalorder %s46, %s48
      %p55 = scmp.eq.s32.totalorder %s17, 1
      %p56 = por %p54, %p55
      %p57 = scmp.ne.s32.totalorder %s48, %s49
      %p58 = scmp.eq.s32.totalorder %s17, 0
      %p59 = por %p57, %p58
      %p60 = scmp.ne.s32.totalorder %s48, %s49
      %p61 = scmp.eq.s32.totalorder %s18, 1
      %p62 = por %p60, %p61
      %p64 = scmp.ne.s32.totalorder %s49, %s63
      %p65 = scmp.eq.s32.totalorder %s18, 0
      %p66 = por %p64, %p65
      %s68 = sadd.s32 %s67, 1
      %p71 = scmp.eq.s32.totalorder %s12, 1
      %p72 = scmp.ne.s32.totalorder %s67, %s69
      %p73 = scmp.eq.s32.totalorder %s12, 0
      %p74 = por %p72, %p73
      %p75 = scmp.ne.s32.totalorder %s67, %s69
      %p76 = scmp.eq.s32.totalorder %s17, 1
      %p77 = por %p75, %p76
      %p78 = scmp.ne.s32.totalorder %s69, %s70
      %p79 = scmp.eq.s32.totalorder %s17, 0
      %p80 = por %p78, %p79
      %p81 = scmp.ne.s32.totalorder %s69, %s70
      %p82 = scmp.eq.s32.totalorder %s18, 1
      %p83 = por %p81, %p82
      %p85 = scmp.ne.s32.totalorder %s70, %s84
      %p86 = scmp.eq.s32.totalorder %s18, 0
      %p87 = por %p85, %p86
      %s88 = ssub.s32 %s12, %s19
      %p89 = scmp.eq.s32.totalorder %s88, 0
      %s91 = sadd.s32 %s90, 1
      %s92 = scalar_select %p89, %s90, %s91
      %p95 = pneg %p89
      %p96 = scmp.eq.s32.totalorder %s12, 1
      %p97 = por %p95, %p96
      %p98 = scmp.ne.s32.totalorder %s90, %s93
      %p99 = scmp.eq.s32.totalorder %s12, 0
      %p100 = por %p98, %p99
      %p101 = scmp.ne.s32.totalorder %s90, %s93
      %p102 = scmp.eq.s32.totalorder %s17, 1
      %p103 = por %p101, %p102
      %p104 = scmp.ne.s32.totalorder %s93, %s94
      %p105 = scmp.eq.s32.totalorder %s17, 0
      %p106 = por %p104, %p105
      %p107 = scmp.ne.s32.totalorder %s93, %s94
      %p108 = scmp.eq.s32.totalorder %s18, 1
      %p109 = por %p107, %p108
      %p111 = scmp.ne.s32.totalorder %s94, %s110
      %p112 = scmp.eq.s32.totalorder %s18, 0
      %p113 = por %p111, %p112
      %p114 = scmp.le.s32.totalorder 1, %s12
      %p115 = scmp.lt.s32.totalorder %s12, 3
      %p116 = pnand %p114, %p115
      %p117 = pneg %p116
      // Predicated region
      $region9: #{tpu_custom_call.1} parent=5 // pred_check
        _
      $region10: #{tpu_custom_call.1} parent=5 // pred_check_branch
        %119 = sbr.rel (%p116) target = $region12
      $region11: #{tpu_custom_call.1} parent=5 // pred_region
        %s120 = ssub.s32 %s12, 1
        // Predicated region
        $region13: #{tpu_custom_call.1} parent=11 // pred_check
          %p121 = pneg %p59
        $region14: #{tpu_custom_call.1} parent=11 // pred_check_branch
          %123 = sbr.rel (%p121) target = $region16
        $region15: #{tpu_custom_call.1} parent=11 // pred_region
          _
        $region16: #{tpu_custom_call.1} parent=11 // pred_fallthru
          _
        // Predicated region
        $region17: #{tpu_custom_call.1} parent=11 // pred_check
          %p124 = pneg %p80
        $region18: #{tpu_custom_call.1} parent=11 // pred_check_branch
          %126 = sbr.rel (%p124) target = $region20
        $region19: #{tpu_custom_call.1} parent=11 // pred_region
          _
        $region20: #{tpu_custom_call.1} parent=11 // pred_fallthru
          _
      $region12: #{tpu_custom_call.1} parent=5 // pred_fallthru
        _
      %p127 = scmp.lt.s32.totalorder %s12, 2
      // Predicated region
      $region21: #{tpu_custom_call.1} parent=5 // pred_check
        %p128 = pneg %p127
      $region22: #{tpu_custom_call.1} parent=5 // pred_check_branch
        %130 = sbr.rel (%p128) target = $region24
      $region23: #{tpu_custom_call.1} parent=5 // pred_region
        // Predicated region
        $region25: #{tpu_custom_call.1} parent=23 // pred_check
          %p131 = pneg %p32
        $region26: #{tpu_custom_call.1} parent=23 // pred_check_branch
          %133 = sbr.rel (%p131) target = $region28
        $region27: #{tpu_custom_call.1} parent=23 // pred_region
          %p134 = scmp.lt.s32.totalorder %s12, 1
          %s135 = scalar_select %p134, %s12, 1
          %s136 = smul.addr %s135, 10
          %s137 = smul.addr %s136, 8
          %s138 = scalar_lea.vmem %s0, %s137
        $region28: #{tpu_custom_call.1} parent=23 // pred_fallthru
          _
      $region24: #{tpu_custom_call.1} parent=5 // pred_fallthru
        _
      %p139 = scmp.le.s32.totalorder 1, %s12
      %p140 = scmp.lt.s32.totalorder %s12, 3
      %p141 = pnand %p139, %p140
      %p142 = pneg %p141
      // Predicated region
      $region29: #{tpu_custom_call.1} parent=5 // pred_check
        _
      $region30: #{tpu_custom_call.1} parent=5 // pred_check_branch
        %144 = sbr.rel (%p141) target = $region32
      $region31: #{tpu_custom_call.1} parent=5 // pred_region
        %s145 = ssub.s32 %s12, 1
        %p146 = scmp.lt.s32.totalorder %s17, 1
        %s147 = scalar_select %p146, %s17, 1
        %s148 = smul.addr %s147, 10
        %s149 = smul.addr %s148, 8
        %s150 = scalar_lea.vmem %s0, %s149
        %p151 = pneg %p38
        %p152 = pneg %p35
        %p153 = pneg %p59
        %p154 = pneg %p56
        %p155 = pneg %p80
        %p156 = pneg %p77
        %p157 = pneg %p106
        %p158 = pneg %p103
        %s159 = sand.u32 %s93, 1
        %s160 = scalar_lea.sflag [#allocation3], %s159
        %s161 = sand.u32 %s93, 1
        %s162 = smul.addr %s161, 8
        %s163 = scalar_lea.vmem [#allocation2], %s162
        %p164 = scmp.lt.s32.totalorder %s17, 1
        %s165 = scalar_select %p164, %s17, 1
        %s166 = smul.addr %s165, 10
        %s167 = smul.addr %s166, 8
        %s168 = scalar_lea.vmem %s0, %s167
        %v169 = vld [vmem:[%s168] sm:$0xff]
        %v170 = vld [vmem:[%s168 + $0x8] sm:$0xff]
        %v171 = vld [vmem:[%s168 + $0x10] sm:$0xff]
        %v172 = vld [vmem:[%s168 + $0x18] sm:$0xff]
        %v173 = vld [vmem:[%s168 + $0x20] sm:$0xff]
        %v174 = vld [vmem:[%s168 + $0x28] sm:$0xff]
        %v175 = vld [vmem:[%s168 + $0x30] sm:$0xff]
        %v176 = vld [vmem:[%s168 + $0x38] sm:$0xff]
        %v177 = vld [vmem:[%s168 + $0x40] sm:$0xf]
        %v178 = vld [vmem:[%s168 + $0x48] sm:$0xf]
        %v179 = vld [vmem:[%s1] sm:$0xf]
        %v180 = vld [vmem:[%s2] sm:$0xf]
        %182 = vset.pattern.permute.xlu0 0
        %183 = vperm.xlu0 %182, %v180
        %v184 = vpop.permute.xlu0 %183
        %vm186 = vcmask 293888
        %v188 = vsel %vm186, %v179, 0
        %vm190 = vcmask 1043456
        %v192 = vsel %vm190, %v177, 0
        %v195 = vsel %vm190, %v178, 0
        %197 = vmatprep.subr.mxu0 %v170
        %198 = vmatpush1.msra.mxu0 %v169
        %199 = vmatprep.subr.mxu0 %v172
        %200 = vmatpush1.msra.mxu0 %v171
        %201 = vmatprep.subr.mxu0 %v174
        %202 = vmatpush1.msra.mxu0 %v173
        %203 = vmatprep.subr.mxu0 %v176
        %204 = vmatpush1.msra.mxu0 %v175
        %205 = vmatprep.subr.mxu0 %v195
        %206 = vmatpush1.msra.mxu0 %v192
        %207 = vmatprep.subr.mxu0 0.0
        %208 = vmatpush1.msra.mxu0 0.0
        %209 = vmatprep.subr.mxu0 0.0
        %210 = vmatpush1.msra.mxu0 0.0
        %211 = vmatprep.subr.mxu0 0.0
        %212 = vmatpush1.msra.mxu0 0.0
        %213 = vmatprep.subr.mxu0 0.0
        %214 = vmatpush1.msra.mxu0 0.0
        %215 = vmatprep.subr.mxu0 0.0
        %216 = vmatpush1.msra.mxu0 0.0
        %217 = vmatprep.subr.mxu0 0.0
        %218 = vmatpush1.msra.mxu0 0.0
        %219 = vmatprep.subr.mxu0 0.0
        %220 = vmatpush1.msra.mxu0 0.0
        %221 = vmatprep.subr.mxu0 0.0
        %222 = vmatpush1.msra.mxu0 0.0
        %223 = vmatprep.subr.mxu0 0.0
        %224 = vmatpush1.msra.mxu0 0.0
        %225 = vmatprep.subr.mxu0 0.0
        %226 = vmatpush1.msra.mxu0 0.0
        %227 = vmatprep.subr.mxu0 0.0
        %228 = vmatpush1.msra.mxu0 0.0
        %229 = vmatprep.subr.mxu0 0.0
        %230 = vmatpush1.msra.mxu0 0.0
        %231 = vmatprep.subr.mxu0 0.0
        %232 = vmatpush1.msra.mxu0 0.0
        %233 = vmatprep.subr.mxu0 0.0
        %234 = vmatpush1.msra.mxu0 0.0
        %235 = vmatprep.subr.mxu0 0.0
        %236 = vmatpush1.msra.mxu0 0.0
        %237 = vmatprep.subr.mxu0 0.0
        %238 = vmatpush1.msra.mxu0 0.0
        %239 = vmatprep.subr.mxu0 0.0
        %240 = vmatpush1.msra.mxu0 0.0
        %241 = vmatprep.subr.mxu0 0.0
        %242 = vmatpush1.msra.mxu0 0.0
        %243 = vmatprep.subr.mxu0 0.0
        %244 = vmatpush1.msra.mxu0 0.0
        %245 = vmatprep.subr.mxu0 0.0
        %246 = vmatpush1.msra.mxu0 0.0
        %247 = vmatprep.subr.mxu0 0.0
        %248 = vmatpush1.msra.mxu0 0.0
        %249 = vmatprep.subr.mxu0 0.0
        %250 = vmatpush1.msra.mxu0 0.0
        %251 = vmatprep.subr.mxu0 0.0
        %252 = vmatpush1.msra.mxu0 0.0
        %253 = vmatprep.subr.mxu0 0.0
        %254 = vmatpush1.msra.mxu0 0.0
        %255 = vmatprep.subr.mxu0 0.0
        %256 = vmatpush1.msra.mxu0 0.0
        %257 = vmatprep.subr.mxu0 0.0
        %258 = vmatpush1.msra.mxu0 0.0
        %259 = vmatprep.subr.mxu0 0.0
        %260 = vmatpush1.msra.mxu0 0.0
        %261 = vmatprep.mubr.f32.mxu0 0.0
        %262 = vmatmul.mubr.f32.gmra.mrb[0].mxu0 %v188
        %v263 = vpop.f32.mrb[0].mxu0
        %v264 = vadd.f32 %v184, %v263
        %v265 = vpop.f32.mrb[0].mxu0
        %v266 = vadd.f32 %v184, %v265
        %267 = vdwg.mxu0
        %vm268 = vcmp.ge.f32.partialorder %v264, 0.0
        %vm269 = vcmp.ge.f32.partialorder %v266, 0.0
        %v270 = vmul.f32 %v264, 0.01
        %v271 = vmul.f32 %v266, 0.01
        %v272 = vsel %vm268, %v264, %v270
        %v273 = vsel %vm269, %v266, %v271
        %274 = vset.pattern.permute.xlu0 1
        %275 = vperm.xlu0 %274, %v180
        %v276 = vpop.permute.xlu0 %275
        %v278 = vmul.f32 %v272, %v276
        %v279 = vmul.f32 %v273, %v276
        %280 = vset.pattern.permute.xlu0 2
        %281 = vperm.xlu0 %280, %v180
        %v282 = vpop.permute.xlu0 %281
        %v284 = vadd.f32 %v278, %v282
        %v285 = vadd.f32 %v279, %v282
        %v288 = vcombine.low %v284, %v285
        %290 = vst [vmem:[%s163] sm:$0xff] %v288
        %s291 = sand.u32 %s93, 1
        %s292 = scalar_lea.sflag [#allocation3], %s291
        %s293 = sand.u32 %s93, 1
        %s294 = smul.addr %s293, 8
        %s295 = scalar_lea.vmem [#allocation2], %s294
        // Predicated region
        $region33: #{tpu_custom_call.1} parent=31 // pred_check
          %p296 = pneg %p103
        $region34: #{tpu_custom_call.1} parent=31 // pred_check_branch
          %298 = sbr.rel (%p296) target = $region36
        $region35: #{tpu_custom_call.1} parent=31 // pred_region
          %s300 = ssub.s32 128, 128
          %301 = vsyncadd %s292, %s300
          %s302 = smul.addr %s17, 2
          %s303 = smul.addr %s302, 64
          %s304 = scalar_lea.hbm %s3, %s303
          %s306 = sshll.u32 %s295, 4
          %s307 = int_to_ptr.vmem [resolvable:$true] %s306
          %309 = dma.vmem_to_hbm [thread:$0]  %s307, 128, %s304, %s292
        $region36: #{tpu_custom_call.1} parent=31 // pred_fallthru
          _
      $region32: #{tpu_custom_call.1} parent=5 // pred_fallthru
        _
      %p310 = scmp.le.s32.totalorder 2, %s12
      // Predicated region
      $region37: #{tpu_custom_call.1} parent=5 // pred_check
        %p311 = pneg %p310
      $region38: #{tpu_custom_call.1} parent=5 // pred_check_branch
        %313 = sbr.rel (%p311) target = $region40
      $region39: #{tpu_custom_call.1} parent=5 // pred_region
        %s314 = ssub.s32 %s12, 2
        // Predicated region
        $region41: #{tpu_custom_call.1} parent=39 // pred_check
          %p315 = pneg %p109
        $region42: #{tpu_custom_call.1} parent=39 // pred_check_branch
          %317 = sbr.rel (%p315) target = $region44
        $region43: #{tpu_custom_call.1} parent=39 // pred_region
          %s318 = sand.u32 %s94, 1
          %s319 = scalar_lea.sflag [#allocation3], %s318
          %s320 = sand.u32 %s94, 1
          %s321 = smul.addr %s320, 8
          %s322 = scalar_lea.vmem [#allocation2], %s321
          %323 = dma.done %s319, 128
        $region44: #{tpu_custom_call.1} parent=39 // pred_fallthru
          _
      $region40: #{tpu_custom_call.1} parent=5 // pred_fallthru
        _
    $region6: #{tpu_custom_call.1} parent=1 // loop_footer
      %s16 = sadd.s32 1, %s12
    $region7: #{tpu_custom_call.1} parent=1 // loop_footer_branch
      %11 = sbr.rel target = $region3
    $region8: #{tpu_custom_call.1} parent=1 // loop_exit
      _
    %324 = vsyncpa [#allocation3], 1
    %s325 = scalar_lea.sflag [#allocation3], 1
    %326 = vsyncpa %s325, 1

</llo_original>
